<compile_context>
chip_gen: v5e
topology: v5e:2x2
jax: 0.10.0
libtpu: 0.0.40
codegen_flags: <defaults>
</compile_context>

<pallas_src>
import jax
import jax.numpy as jnp
from jax.experimental import pallas as pl
from jax.experimental.pallas import tpu as pltpu


_MAX_CHUNKS = 4                         # a few large DMA descriptors is plenty
_MIN_BYTES_PER_CHUNK = 4 * 1024 * 1024  # don't bother splitting small copies


def _make_identity_dma_kernel(num_chunks: int, chunk_rows: int, leading: int):
    """Build an HBM→HBM DMA copy kernel (x_hbm, o_hbm are raw HBM refs)."""
    if num_chunks == 1:
        def kernel(x_hbm, o_hbm, sem):
            cp = pltpu.make_async_copy(x_hbm, o_hbm, sem.at[0])
            cp.start()
            cp.wait()
        return kernel

    def kernel(x_hbm, o_hbm, sem):
        # Issue all chunk DMAs first (start), then wait on all of them, so the
        # DMA engines overlap across chunks.  Starts/sizes are static Python
        # ints — the last chunk absorbs any remainder.
        copies = []
        for c in range(num_chunks):
            start = c * chunk_rows
            size = min(chunk_rows, leading - start)
            cp = pltpu.make_async_copy(
                x_hbm.at[pl.ds(start, size)],
                o_hbm.at[pl.ds(start, size)],
                sem.at[c],
            )
            cp.start()
            copies.append(cp)
        for cp in copies:
            cp.wait()
    return kernel


def identity(x: jax.Array, *, use_pallas: bool = False,
             alias_in_out: bool = False, chunks: int | None = None) -> jax.Array:
    """Identity forward pass: returns a tensor identical to x (same shape/dtype).

    Defaults (`use_pallas=False`) return x directly — the truly optimal
    Identity is no kernel and no HBM traffic at all.

    alias_in_out=True models a donated/aliased input buffer: since aliasing
    cannot elide a Pallas copy's 2N bytes of HBM traffic, we short-circuit and
    return x itself (zero traffic) instead of launching the kernel.

    use_pallas=True materializes a fresh copy via a direct HBM→HBM DMA kernel
    (no VMEM bounce, no tiling constraints), optionally split into a few
    concurrent chunks along the leading axis (`chunks` overrides the heuristic).
    """
    if not use_pallas or alias_in_out or x.ndim == 0 or x.size == 0:
        # Zero-copy path: the fastest Identity is the one that moves no bytes.
        return x

    leading = x.shape[0]
    total_bytes = x.size * jnp.dtype(x.dtype).itemsize

    # ---- Pick a small number of large DMA chunks (static Python ints) ------
    if chunks is None:
        chunks = min(_MAX_CHUNKS, max(1, total_bytes // _MIN_BYTES_PER_CHUNK))
    num_chunks = int(max(1, min(chunks, leading)))
    chunk_rows = -(-leading // num_chunks)            # ceil division
    num_chunks = -(-leading // chunk_rows)            # drop empty tail chunks

    kernel = _make_identity_dma_kernel(num_chunks, chunk_rows, leading)

    return pl.pallas_call(
        kernel,
        out_shape=jax.ShapeDtypeStruct(x.shape, x.dtype),
        # Raw HBM refs on both sides: the kernel is pure DMA, no auto-pipelining.
        in_specs=[pl.BlockSpec(memory_space=pl.ANY)],
        out_specs=pl.BlockSpec(memory_space=pl.ANY),
        scratch_shapes=[pltpu.SemaphoreType.DMA((num_chunks,))],
        compiler_params=pltpu.CompilerParams(has_side_effects=True),
    )(x)


if __name__ == "__main__":
    key = jax.random.PRNGKey(0)

    # Small NCHW input consistent with a generic forward: batch=2, channels=4, 16x16 spatial.
    x = jax.random.normal(key, (2, 4, 16, 16), dtype=jnp.float32)
    y = identity(x, use_pallas=True)
    jax.block_until_ready(y)
    assert y.shape == x.shape and y.dtype == x.dtype
    assert bool(jnp.all(y == x))

    # bf16 path (DMA copy is dtype-agnostic).
    xb = jax.random.normal(jax.random.PRNGKey(1), (2, 4, 16, 16)).astype(jnp.bfloat16)
    yb = identity(xb, use_pallas=True)
    jax.block_until_ready(yb)
    assert yb.shape == xb.shape and yb.dtype == xb.dtype
    assert bool(jnp.all(yb == xb))

    # Odd, non-128-divisible shape: the HBM->HBM DMA has no lane constraints.
    xo = jax.random.normal(jax.random.PRNGKey(2), (3, 5, 7), dtype=jnp.float32)
    yo = identity(xo, use_pallas=True)
    jax.block_until_ready(yo)
    assert yo.shape == xo.shape and bool(jnp.all(yo == xo))

    # Multi-chunk DMA path (uneven chunks: leading=8 split into 3/3/2 rows).
    xc = jax.random.normal(jax.random.PRNGKey(3), (8, 32, 128), dtype=jnp.float32)
    yc = identity(xc, use_pallas=True, chunks=3)
    jax.block_until_ready(yc)
    assert yc.shape == xc.shape and bool(jnp.all(yc == xc))

    # Zero-copy paths: default (no kernel) and donated/aliased input.
    assert identity(x) is x
    assert identity(x, use_pallas=True, alias_in_out=True) is x

    print("KERNEL_OK")
</pallas_src>

<mosaic_0001>
module attributes {stable_mosaic.version = 11 : i64} {
  func.func @kernel(%arg0: memref<2x4x16x16xf32, #tpu.memory_space<any>>, %arg1: memref<2x4x16x16xf32, #tpu.memory_space<any>>, %arg2: memref<1x!tpu.dma_semaphore, #tpu.memory_space<semaphore_mem>>) attributes {dimension_semantics = [], scalar_prefetch = 0 : i64, scratch_operands = 1 : i64, tpu.core_type = #tpu.core_type<tc>} {
    %c0_i32 = arith.constant 0 : i32
    %0 = tpu.memref_slice %arg2[%c0_i32] : memref<1x!tpu.dma_semaphore, #tpu.memory_space<semaphore_mem>> -> memref<1x!tpu.dma_semaphore, #tpu.memory_space<semaphore_mem>>
    %1 = tpu.memref_squeeze %0 : memref<1x!tpu.dma_semaphore, #tpu.memory_space<semaphore_mem>> -> memref<!tpu.dma_semaphore, #tpu.memory_space<semaphore_mem>>
    tpu.enqueue_dma source(%arg0 : memref<2x4x16x16xf32, #tpu.memory_space<any>>) target(%arg1 : memref<2x4x16x16xf32, #tpu.memory_space<any>>) target_semaphore(%1 : memref<!tpu.dma_semaphore, #tpu.memory_space<semaphore_mem>>)
    %c0_i32_0 = arith.constant 0 : i32
    %2 = tpu.memref_slice %arg2[%c0_i32_0] : memref<1x!tpu.dma_semaphore, #tpu.memory_space<semaphore_mem>> -> memref<1x!tpu.dma_semaphore, #tpu.memory_space<semaphore_mem>>
    %3 = tpu.memref_squeeze %2 : memref<1x!tpu.dma_semaphore, #tpu.memory_space<semaphore_mem>> -> memref<!tpu.dma_semaphore, #tpu.memory_space<semaphore_mem>>
    tpu.wait_dma2 semaphore(%3 : memref<!tpu.dma_semaphore, #tpu.memory_space<semaphore_mem>>) src(%arg0 : memref<2x4x16x16xf32, #tpu.memory_space<any>>) dst(%arg1 : memref<2x4x16x16xf32, #tpu.memory_space<any>>)
    return
  }
}

</mosaic_0001>

<llo_original>
// kernel: tpu_custom_call.1
$region0: #{tpu_custom_call.1}
  #allocation0 [shape = 'u32[]', space=smem, size = 0x4, offset = 0x4, fixed_abs, tag = 'smem constant byte address 0x4 - core index']
  #allocation1 [shape = 'u32[72,128]{1,0:T(1,128)}', space=vmem, size = 0x9000, scoped, tag = 'internal scratch']
  #allocation2 [shape = 's32[1]{0}', space=sflag, size = 0x4, scoped, tag = 'scratch operand']
  #allocation3 [shape = 's32[]', space=sflag, size = 0x4, offset = 0, fixed_abs, tag = 'sflag constant byte address 0x0 - dummy sync flag']
  #allocation4 [shape = 'u32[0]{0}', space=smem, size = 0, offset = 0, fixed_abs, tag = 'smem constant byte address 0x0 - null']
  %s0 = inlined_call_operand.hbm [shape: f32[2,4,16,16], index: 0, kind: input, shape index: {}]
  %s1 = inlined_call_operand.hbm [shape: f32[2,4,16,16], index: 1, kind: output, shape index: {}]
  %s2 = sld [smem:[#allocation0]]
  $region2: #{tpu_custom_call.1} parent=0
    _
  %s4 = ssub.s32 1, %s2
  %s5 = scalar_select 0, %s4, %s2
  %s7 = sshll.u32 1, 14
  %s8 = sxor.u32 4294967295, %s7
  %s10 = sshll.u32 %s0, 4
  %s11 = int_to_ptr.hbm [resolvable:$true] %s10
  %s12 = sshll.u32 %s1, 4
  %s13 = int_to_ptr.hbm [resolvable:$true] %s12
  %16 = dma.general %s11, 2048, %s13, [#allocation2], [#allocation3], [#allocation4], 0, 0
  %s17 = smul.u32 2, 4
  %s18 = smul.u32 %s17, 16
  %s19 = smul.u32 %s18, 1
  %s20 = sshll.u32 %s19, 4
  %21 = dma.done [#allocation2], %s20
  %22 = vsyncmov [#allocation2]
  %s23 = vpop.sfrf %22
  %p24 = scmp.eq.s32.totalorder %s23, 0
  %p25 = pneg %p24
  %27 = shalt.err (%p25)

</llo_original>
